<compile_context>
chip_gen: v7x
topology: tpu7x:2x2x1
jax: 0.10.0
libtpu: 0.0.40
codegen_flags: <defaults>
</compile_context>

<pallas_src>
import jax
import jax.numpy as jnp
from jax.experimental import pallas as pl
from jax.experimental.pallas import tpu as pltpu


def _attention_kernel(x_ref, wred_ref, wexp_ref, o_ref):
    """One (Bb, T*D) lane-dense tile of batch rows.

    x_ref    : (Bb, T*D) input slab (fp32 or bf16)
    wred_ref : (T*D, T)  kron(eye(T), w[:, None])     -> D-reduction on the MXU
    wexp_ref : (T, T*D)  kron(eye(T), ones((1, D)))   -> D-broadcast on the MXU
    o_ref    : (Bb, T*D) output slab
    """
    # tanh in f32; consumed immediately by the MXU matmul (short live range).
    m = jnp.tanh(x_ref[...].astype(jnp.float32))                            # (Bb, T*D)

    # scores[b, t] = sum_d tanh(x[b, t, d]) * w[d]  -- one MXU matmul.
    scores = jnp.dot(m, wred_ref[...], preferred_element_type=jnp.float32)  # (Bb, T)

    # softmax over the sequence axis (PyTorch dim=1).
    scores = scores - jnp.max(scores, axis=-1, keepdims=True)
    e = jnp.exp(scores)
    alpha = e * pl.reciprocal(jnp.sum(e, axis=-1, keepdims=True), approx=True)  # (Bb, T)

    # alpha_full[b, t*D + d] = alpha[b, t]  -- second small MXU matmul; keeps the
    # store lane-dense (last dim T*D, multiple of 128) with no in-kernel reshape.
    alpha_full = jnp.dot(alpha, wexp_ref[...], preferred_element_type=jnp.float32)  # (Bb, T*D)

    # Re-read x for the final scale so only one full-tile f32 temp is live at a time.
    o_ref[...] = (x_ref[...].astype(jnp.float32) * alpha_full).astype(o_ref.dtype)


def _choose_block_b(B, TD, itemsize):
    """Pick a batch-tile so each I/O buffer is a few MiB (mem-bound kernel),
    the second-minor block dim is a multiple of 8 (or the full batch), and the
    grid has >= 2 steps for large batches (feeds both TensorCores on v7x)."""
    target_bytes = 4 * 1024 * 1024                 # ~4 MiB per buffer; x2 dbl-buffer
    bb = max(1, target_bytes // max(TD * itemsize, 1))
    if bb >= B:
        if B >= 16:
            half = -(-B // 2)                      # ceil(B/2)
            return (-(-half // 8)) * 8             # round up to a multiple of 8
        return B                                   # full-batch block (legal: full dim)
    return max(8, (bb // 8) * 8)                   # multiple of 8 sublanes


def attention_forward(x, w):
    """x: (B, T, D), w: (D,) -> (B, T, D).  Equivalent to the PyTorch Attention."""
    B, T, D = x.shape
    TD = T * D
    block_b = _choose_block_b(B, TD, jnp.dtype(x.dtype).itemsize)
    grid_b = pl.cdiv(B, block_b)

    # Lane-dense I/O view: last dim T*D (multiple of 128 for the example sizes).
    x_flat = x.reshape(B, TD)

    wf = w.astype(jnp.float32)
    # Block-diagonal helpers so the kernel never reshapes the (Bb, T*D) slab.
    w_reduce = jnp.kron(jnp.eye(T, dtype=jnp.float32), wf.reshape(D, 1))            # (T*D, T)
    w_expand = jnp.kron(jnp.eye(T, dtype=jnp.float32), jnp.ones((1, D), jnp.float32))  # (T, T*D)

    out_flat = pl.pallas_call(
        _attention_kernel,
        out_shape=jax.ShapeDtypeStruct((B, TD), x.dtype),
        grid_spec=pltpu.PrefetchScalarGridSpec(
            num_scalar_prefetch=0,
            grid=(grid_b,),
            in_specs=[
                pl.BlockSpec((block_b, TD), lambda b: (b, 0)),
                pl.BlockSpec((TD, T), lambda b: (0, 0)),
                pl.BlockSpec((T, TD), lambda b: (0, 0)),
            ],
            out_specs=pl.BlockSpec((block_b, TD), lambda b: (b, 0)),
        ),
        compiler_params=pltpu.CompilerParams(
            dimension_semantics=("parallel",),
            # ~4 MiB tiles, double-buffered in+out  =>  ~17 MiB used; raise the
            # scoped limit above the 16/32 MiB defaults so the pipeline isn't shrunk.
            vmem_limit_bytes=64 * 1024 * 1024,
        ),
    )(x_flat, w_reduce, w_expand)
    return out_flat.reshape(B, T, D)


def attention_reference(x, w):
    m = jnp.tanh(x)
    scores = jnp.einsum("btd,d->bt", m.astype(jnp.float32), w.astype(jnp.float32))
    alpha = jax.nn.softmax(scores, axis=1)[..., None]
    return (x.astype(jnp.float32) * alpha).astype(x.dtype)


if __name__ == "__main__":
    key = jax.random.PRNGKey(0)
    kx, kw = jax.random.split(key)

    B, T, D = 2, 8, 32  # batch, sequence length, embedding_dim
    x = jax.random.normal(kx, (B, T, D), dtype=jnp.float32)
    # Parameter init mirrors self.w.data.normal_(mean=0.0, std=0.05)
    w = 0.05 * jax.random.normal(kw, (D,), dtype=jnp.float32)

    out = jax.block_until_ready(attention_forward(x, w))
    ref = attention_reference(x, w)

    assert out.shape == (B, T, D)
    # approx=True reciprocal (EUP) -> slightly looser tolerance than exact recip.
    assert jnp.allclose(out, ref, atol=1e-3, rtol=1e-3), "mismatch vs reference"

    print("KERNEL_OK")
</pallas_src>

<mosaic_0001>
module attributes {stable_mosaic.version = 11 : i64} {
  func.func @_attention_kernel(%arg0: i32, %arg1: memref<2x256xf32, #tpu.memory_space<vmem>>, %arg2: memref<256x8xf32, #tpu.memory_space<vmem>>, %arg3: memref<8x256xf32, #tpu.memory_space<vmem>>, %arg4: memref<2x256xf32, #tpu.memory_space<vmem>>) attributes {dimension_semantics = [#tpu.dimension_semantics<parallel>], iteration_bounds = array<i64: 1>, scalar_prefetch = 0 : i64, scratch_operands = 0 : i64, tpu.core_type = #tpu.core_type<tc>, window_params = [{transform_indices = @transform_0, window_bounds = array<i64: 2, 256>}, {pipeline_mode = #tpu.pipeline_mode<synchronous>, transform_indices = @transform_1, window_bounds = array<i64: 256, 8>}, {pipeline_mode = #tpu.pipeline_mode<synchronous>, transform_indices = @transform_2, window_bounds = array<i64: 8, 256>}, {transform_indices = @transform_3, window_bounds = array<i64: 2, 256>}]} {
    %c0 = arith.constant 0 : index
    %c0_0 = arith.constant 0 : index
    %0 = vector.load %arg1[%c0, %c0_0] : memref<2x256xf32, #tpu.memory_space<vmem>>, vector<2x256xf32>
    %1 = math.tanh %0 : vector<2x256xf32>
    %c0_1 = arith.constant 0 : index
    %c0_2 = arith.constant 0 : index
    %2 = vector.load %arg2[%c0_1, %c0_2] : memref<256x8xf32, #tpu.memory_space<vmem>>, vector<256x8xf32>
    %cst = arith.constant dense<0.000000e+00> : vector<2x8xf32>
    %3 = tpu.matmul %1, %2, %cst {dimension_numbers = #tpu.dot_dimension_numbers<[1], [0], [0], [1], [0, 0, 1, 1], [], []>} : vector<2x256xf32>, vector<256x8xf32>, vector<2x8xf32> -> vector<2x8xf32>
    %cst_3 = arith.constant dense<0xFF800000> : vector<2xf32>
    %4 = vector.multi_reduction <maximumf>, %3, %cst_3 [1] : vector<2x8xf32> to vector<2xf32>
    %5 = vector.shape_cast %4 : vector<2xf32> to vector<2x1xf32>
    %6 = vector.broadcast %5 : vector<2x1xf32> to vector<2x8xf32>
    %7 = arith.subf %3, %6 : vector<2x8xf32>
    %8 = math.exp %7 : vector<2x8xf32>
    %cst_4 = arith.constant dense<0.000000e+00> : vector<2xf32>
    %9 = vector.multi_reduction <add>, %8, %cst_4 [1] : vector<2x8xf32> to vector<2xf32>
    %10 = vector.shape_cast %9 : vector<2xf32> to vector<2x1xf32>
    %11 = tpu.reciprocal %10 {approx = true} : vector<2x1xf32> -> vector<2x1xf32>
    %12 = vector.broadcast %11 : vector<2x1xf32> to vector<2x8xf32>
    %13 = arith.mulf %8, %12 : vector<2x8xf32>
    %c0_5 = arith.constant 0 : index
    %c0_6 = arith.constant 0 : index
    %14 = vector.load %arg3[%c0_5, %c0_6] : memref<8x256xf32, #tpu.memory_space<vmem>>, vector<8x256xf32>
    %cst_7 = arith.constant dense<0.000000e+00> : vector<2x256xf32>
    %15 = tpu.matmul %13, %14, %cst_7 {dimension_numbers = #tpu.dot_dimension_numbers<[1], [0], [0], [1], [0, 0, 1, 1], [], []>} : vector<2x8xf32>, vector<8x256xf32>, vector<2x256xf32> -> vector<2x256xf32>
    %c0_8 = arith.constant 0 : index
    %c0_9 = arith.constant 0 : index
    %16 = vector.load %arg1[%c0_8, %c0_9] : memref<2x256xf32, #tpu.memory_space<vmem>>, vector<2x256xf32>
    %17 = arith.mulf %16, %15 : vector<2x256xf32>
    %c0_10 = arith.constant 0 : index
    %c0_11 = arith.constant 0 : index
    %18 = vector.load %arg4[%c0_10, %c0_11] : memref<2x256xf32, #tpu.memory_space<vmem>>, vector<2x256xf32>
    tpu.vector_store %arg4[%c0_10, %c0_11], %17 {strides = array<i32>} : memref<2x256xf32, #tpu.memory_space<vmem>>, vector<2x256xf32>,
    return
  }
  func.func @transform_0(%arg0: i32) -> (i32, i32) {
    %c0_i32 = arith.constant 0 : i32
    %c0_i32_0 = arith.constant 0 : i32
    return %arg0, %c0_i32 : i32, i32
  }
  func.func @transform_1(%arg0: i32) -> (i32, i32) {
    %c0_i32 = arith.constant 0 : i32
    %c0_i32_0 = arith.constant 0 : i32
    %c0_i32_1 = arith.constant 0 : i32
    return %c0_i32, %c0_i32_0 : i32, i32
  }
  func.func @transform_2(%arg0: i32) -> (i32, i32) {
    %c0_i32 = arith.constant 0 : i32
    %c0_i32_0 = arith.constant 0 : i32
    %c0_i32_1 = arith.constant 0 : i32
    return %c0_i32, %c0_i32_0 : i32, i32
  }
  func.func @transform_3(%arg0: i32) -> (i32, i32) {
    %c0_i32 = arith.constant 0 : i32
    %c0_i32_0 = arith.constant 0 : i32
    return %arg0, %c0_i32 : i32, i32
  }
}

</mosaic_0001>

<llo_original>
// kernel: tpu_custom_call.1
$region0: #{tpu_custom_call.1}
  #allocation0 [shape = 'u32[]', space=smem, size = 0x4, offset = 0x4, fixed_abs, tag = 'smem constant byte address 0x4 - core index']
  #allocation1 [shape = 'u32[144,128]{1,0:T(1,128)}', space=vmem, size = 0x12000, scoped, tag = 'internal scratch']
  %s0 = inlined_call_operand.hbm [shape: f32[2,256], index: 0, kind: input, shape index: {}]
  %s1 = inlined_call_operand.hbm [shape: f32[256,8], index: 1, kind: input, shape index: {}]
  %s2 = inlined_call_operand.hbm [shape: f32[8,256], index: 2, kind: input, shape index: {}]
  %s3 = inlined_call_operand.hbm [shape: f32[2,256], index: 3, kind: output, shape index: {}]
  %s4 = sld [smem:[#allocation0]]
  $region34: #{tpu_custom_call.1} parent=0
    _
  %s6 = ssub.s32 1, %s4
  %s7 = scalar_select 0, %s6, %s4
  $region1: #{tpu_custom_call.1} parent=0
    #allocation2 [shape = 'u8[2048]{0}', space=vmem, size = 0x800, scoped, tag = 'input window, operand 0, single buffered']
    #allocation3 [shape = 's32[1]{0}', space=sflag, size = 0x4, scoped, tag = 'scoped memory for tpu_custom_call.1']
    #allocation4 [shape = 's32[1]{0}', space=sflag, size = 0x4, scoped, tag = 'scoped memory for tpu_custom_call.1']
    #allocation5 [shape = 'u8[131072]{0}', space=vmem, size = 0x20000, scoped, tag = 'input window, operand 1, single buffered']
    #allocation6 [shape = 's32[1]{0}', space=sflag, size = 0x4, scoped, tag = 'scoped memory for tpu_custom_call.1']
    #allocation7 [shape = 'u8[8192]{0}', space=vmem, size = 0x2000, scoped, tag = 'input window, operand 2, single buffered']
    #allocation8 [shape = 'u8[2048]{0}', space=vmem, size = 0x800, scoped, tag = 'output window, operand 0, single buffered']
    %8 = vsyncpa [#allocation3], 0
    %9 = vsyncpa [#allocation6], 0
    %10 = vsyncpa [#allocation4], 0
    // Predicated region
    $region2: #{tpu_custom_call.1} parent=1 // pred_check
      _
    $region3: #{tpu_custom_call.1} parent=1 // pred_check_branch
      %12 = sbr.rel (0) target = $region5
    $region4: #{tpu_custom_call.1} parent=1 // pred_region
      %s14 = ssub.s32 64, 64
      %15 = vsyncadd [#allocation3], %s14
      %s17 = sshll.u32 [#allocation2], 4
      %s18 = int_to_ptr.vmem [resolvable:$true] %s17
      %20 = dma.hbm_to_vmem [thread:$0]  %s0, 64, %s18, [#allocation3]
    $region5: #{tpu_custom_call.1} parent=1 // pred_fallthru
      _
    // Predicated region
    $region6: #{tpu_custom_call.1} parent=1 // pred_check
      _
    $region7: #{tpu_custom_call.1} parent=1 // pred_check_branch
      %22 = sbr.rel (0) target = $region9
    $region8: #{tpu_custom_call.1} parent=1 // pred_region
      %s24 = ssub.s32 4096, 4096
      %25 = vsyncadd [#allocation6], %s24
      %s26 = sshll.u32 [#allocation5], 4
      %s27 = int_to_ptr.vmem [resolvable:$true] %s26
      %32 = dma.hbm_to_vmem [thread:$0]  %s1, 4096, %s27, [#allocation6], 128, 128, 8
    $region9: #{tpu_custom_call.1} parent=1 // pred_fallthru
      _
    // Predicated region
    $region10: #{tpu_custom_call.1} parent=1 // pred_check
      _
    $region11: #{tpu_custom_call.1} parent=1 // pred_check_branch
      %34 = sbr.rel (0) target = $region13
    $region12: #{tpu_custom_call.1} parent=1 // pred_region
      %s36 = ssub.s32 256, 256
      %37 = vsyncadd [#allocation6], %s36
      %s39 = sshll.u32 [#allocation7], 4
      %s40 = int_to_ptr.vmem [resolvable:$true] %s39
      %42 = dma.hbm_to_vmem [thread:$0]  %s2, 256, %s40, [#allocation6]
    $region13: #{tpu_custom_call.1} parent=1 // pred_fallthru
      _
    // Predicated region
    $region14: #{tpu_custom_call.1} parent=1 // pred_check
      _
    $region15: #{tpu_custom_call.1} parent=1 // pred_check_branch
      %44 = sbr.rel (0) target = $region17
    $region16: #{tpu_custom_call.1} parent=1 // pred_region
      %45 = dma.done [#allocation3], 64
    $region17: #{tpu_custom_call.1} parent=1 // pred_fallthru
      _
    // Predicated region
    $region18: #{tpu_custom_call.1} parent=1 // pred_check
      _
    $region19: #{tpu_custom_call.1} parent=1 // pred_check_branch
      %47 = sbr.rel (0) target = $region21
    $region20: #{tpu_custom_call.1} parent=1 // pred_region
      %48 = dma.done [#allocation6], 4096
    $region21: #{tpu_custom_call.1} parent=1 // pred_fallthru
      _
    // Predicated region
    $region22: #{tpu_custom_call.1} parent=1 // pred_check
      _
    $region23: #{tpu_custom_call.1} parent=1 // pred_check_branch
      %50 = sbr.rel (0) target = $region25
    $region24: #{tpu_custom_call.1} parent=1 // pred_region
      %51 = dma.done [#allocation6], 256
    $region25: #{tpu_custom_call.1} parent=1 // pred_fallthru
      _
    %v52 = vld [vmem:[#allocation2] sm:$0xf]
    %v53 = vtanh.pop %v52
    %v54 = vld [vmem:[#allocation5] sm:$0xff]
    %v55 = vld [vmem:[#allocation5 + $0x8] sm:$0xff]
    %v56 = vld [vmem:[#allocation5 + $0x10] sm:$0xff]
    %v57 = vld [vmem:[#allocation5 + $0x18] sm:$0xff]
    %v58 = vld [vmem:[#allocation5 + $0x20] sm:$0xff]
    %v59 = vld [vmem:[#allocation5 + $0x28] sm:$0xff]
    %v60 = vld [vmem:[#allocation5 + $0x30] sm:$0xff]
    %v61 = vld [vmem:[#allocation5 + $0x38] sm:$0xff]
    %v62 = vld [vmem:[#allocation5 + $0x40] sm:$0xff]
    %v63 = vld [vmem:[#allocation5 + $0x48] sm:$0xff]
    %v64 = vld [vmem:[#allocation5 + $0x50] sm:$0xff]
    %v65 = vld [vmem:[#allocation5 + $0x58] sm:$0xff]
    %v66 = vld [vmem:[#allocation5 + $0x60] sm:$0xff]
    %v67 = vld [vmem:[#allocation5 + $0x68] sm:$0xff]
    %v68 = vld [vmem:[#allocation5 + $0x70] sm:$0xff]
    %v69 = vld [vmem:[#allocation5 + $0x78] sm:$0xff]
    %v70 = vld [vmem:[#allocation5 + $0x80] sm:$0xff]
    %v71 = vld [vmem:[#allocation5 + $0x88] sm:$0xff]
    %v72 = vld [vmem:[#allocation5 + $0x90] sm:$0xff]
    %v73 = vld [vmem:[#allocation5 + $0x98] sm:$0xff]
    %v74 = vld [vmem:[#allocation5 + $0xa0] sm:$0xff]
    %v75 = vld [vmem:[#allocation5 + $0xa8] sm:$0xff]
    %v76 = vld [vmem:[#allocation5 + $0xb0] sm:$0xff]
    %v77 = vld [vmem:[#allocation5 + $0xb8] sm:$0xff]
    %v78 = vld [vmem:[#allocation5 + $0xc0] sm:$0xff]
    %v79 = vld [vmem:[#allocation5 + $0xc8] sm:$0xff]
    %v80 = vld [vmem:[#allocation5 + $0xd0] sm:$0xff]
    %v81 = vld [vmem:[#allocation5 + $0xd8] sm:$0xff]
    %v82 = vld [vmem:[#allocation5 + $0xe0] sm:$0xff]
    %v83 = vld [vmem:[#allocation5 + $0xe8] sm:$0xff]
    %v84 = vld [vmem:[#allocation5 + $0xf0] sm:$0xff]
    %v85 = vld [vmem:[#allocation5 + $0xf8] sm:$0xff]
    %v88 = vunpack.c.l.s4 1983009808
    %v89 = vunpack.c.0.s8 %v88
    %v90 = vlaneseq
    %v91 = vshrl.u32 %v90, 7
    %v92 = vsub.s32 %v89, %v91
    %v93 = vrot.slane %v53, %v92
    %v94 = vcombine.high %v93, %v93
    %97 = vmatprep.subr.mxu0 0.0
    %98 = vmatpush1.msra.mxu0 %v54
    %99 = vmatprep.subr.mxu0 0.0
    %100 = vmatpush1.msra.mxu0 %v55
    %101 = vmatprep.subr.mxu0 0.0
    %102 = vmatpush1.msra.mxu0 %v56
    %103 = vmatprep.subr.mxu0 0.0
    %104 = vmatpush1.msra.mxu0 %v57
    %105 = vmatprep.subr.mxu0 0.0
    %106 = vmatpush1.msra.mxu0 %v58
    %107 = vmatprep.subr.mxu0 0.0
    %108 = vmatpush1.msra.mxu0 %v59
    %109 = vmatprep.subr.mxu0 0.0
    %110 = vmatpush1.msra.mxu0 %v60
    %111 = vmatprep.subr.mxu0 0.0
    %112 = vmatpush1.msra.mxu0 %v61
    %113 = vmatprep.subr.mxu0 0.0
    %114 = vmatpush1.msra.mxu0 %v62
    %115 = vmatprep.subr.mxu0 0.0
    %116 = vmatpush1.msra.mxu0 %v63
    %117 = vmatprep.subr.mxu0 0.0
    %118 = vmatpush1.msra.mxu0 %v64
    %119 = vmatprep.subr.mxu0 0.0
    %120 = vmatpush1.msra.mxu0 %v65
    %121 = vmatprep.subr.mxu0 0.0
    %122 = vmatpush1.msra.mxu0 %v66
    %123 = vmatprep.subr.mxu0 0.0
    %124 = vmatpush1.msra.mxu0 %v67
    %125 = vmatprep.subr.mxu0 0.0
    %126 = vmatpush1.msra.mxu0 %v68
    %127 = vmatprep.subr.mxu0 0.0
    %128 = vmatpush1.msra.mxu0 %v69
    %129 = vmatprep.subr.mxu0 0.0
    %130 = vmatpush1.msra.mxu0 %v70
    %131 = vmatprep.subr.mxu0 0.0
    %132 = vmatpush1.msra.mxu0 %v71
    %133 = vmatprep.subr.mxu0 0.0
    %134 = vmatpush1.msra.mxu0 %v72
    %135 = vmatprep.subr.mxu0 0.0
    %136 = vmatpush1.msra.mxu0 %v73
    %137 = vmatprep.subr.mxu0 0.0
    %138 = vmatpush1.msra.mxu0 %v74
    %139 = vmatprep.subr.mxu0 0.0
    %140 = vmatpush1.msra.mxu0 %v75
    %141 = vmatprep.subr.mxu0 0.0
    %142 = vmatpush1.msra.mxu0 %v76
    %143 = vmatprep.subr.mxu0 0.0
    %144 = vmatpush1.msra.mxu0 %v77
    %145 = vmatprep.subr.mxu0 0.0
    %146 = vmatpush1.msra.mxu0 %v78
    %147 = vmatprep.subr.mxu0 0.0
    %148 = vmatpush1.msra.mxu0 %v79
    %149 = vmatprep.subr.mxu0 0.0
    %150 = vmatpush1.msra.mxu0 %v80
    %151 = vmatprep.subr.mxu0 0.0
    %152 = vmatpush1.msra.mxu0 %v81
    %153 = vmatprep.subr.mxu0 0.0
    %154 = vmatpush1.msra.mxu0 %v82
    %155 = vmatprep.subr.mxu0 0.0
    %156 = vmatpush1.msra.mxu0 %v83
    %157 = vmatprep.subr.mxu0 0.0
    %158 = vmatpush1.msra.mxu0 %v84
    %159 = vmatprep.subr.mxu0 0.0
    %160 = vmatpush1.msra.mxu0 %v85
    %161 = vmatprep.mubr.f32.mxu0 %v94
    %162 = vmatmul.mubr.f32.gmra.mrb[0].mxu0 %v93
    %v163 = vpop.f32.mrb[0].mxu0
    %v164 = vadd.f32 0.0, %v163
    %v165 = vpop.f32.mrb[0].mxu0
    %166 = vdwg.mxu0
    %vm167 = vcmask 58368
    %v168 = vsel %vm167, %v164, -inf
    %169 = vmax.xlane.f32.xlu0 %v168
    %v170 = vpop.xlane.xlu0 %169
    %v171 = vsub.f32 %v164, %v170
    %v172 = vmul.f32 %v171, 1.442695
    %v173 = vpow.pop %v172
    %v174 = vsel %vm167, %v173, 0.0
    %175 = vadd.xlane.f32.xlu0 %v174
    %v176 = vpop.xlane.xlu0 %175
    %v177 = vrcp.pop %v176
    %v178 = vmul.f32 %v173, %v177
    %v179 = vld [vmem:[#allocation7] sm:$0xff]
    %v180 = vld [vmem:[#allocation7 + $0x8] sm:$0xff]
    %vm181 = vcmask 64512
    %v183 = vsel %vm181, %v178, 0
    %185 = vmatprep.subr.mxu0 %v180
    %186 = vmatpush1.msra.mxu0 %v179
    %187 = vmatprep.subr.mxu0 0.0
    %188 = vmatpush1.msra.mxu0 0.0
    %189 = vmatprep.subr.mxu0 0.0
    %190 = vmatpush1.msra.mxu0 0.0
    %191 = vmatprep.subr.mxu0 0.0
    %192 = vmatpush1.msra.mxu0 0.0
    %193 = vmatprep.subr.mxu0 0.0
    %194 = vmatpush1.msra.mxu0 0.0
    %195 = vmatprep.subr.mxu0 0.0
    %196 = vmatpush1.msra.mxu0 0.0
    %197 = vmatprep.subr.mxu0 0.0
    %198 = vmatpush1.msra.mxu0 0.0
    %199 = vmatprep.subr.mxu0 0.0
    %200 = vmatpush1.msra.mxu0 0.0
    %201 = vmatprep.subr.mxu0 0.0
    %202 = vmatpush1.msra.mxu0 0.0
    %203 = vmatprep.subr.mxu0 0.0
    %204 = vmatpush1.msra.mxu0 0.0
    %205 = vmatprep.subr.mxu0 0.0
    %206 = vmatpush1.msra.mxu0 0.0
    %207 = vmatprep.subr.mxu0 0.0
    %208 = vmatpush1.msra.mxu0 0.0
    %209 = vmatprep.subr.mxu0 0.0
    %210 = vmatpush1.msra.mxu0 0.0
    %211 = vmatprep.subr.mxu0 0.0
    %212 = vmatpush1.msra.mxu0 0.0
    %213 = vmatprep.subr.mxu0 0.0
    %214 = vmatpush1.msra.mxu0 0.0
    %215 = vmatprep.subr.mxu0 0.0
    %216 = vmatpush1.msra.mxu0 0.0
    %217 = vmatprep.subr.mxu0 0.0
    %218 = vmatpush1.msra.mxu0 0.0
    %219 = vmatprep.subr.mxu0 0.0
    %220 = vmatpush1.msra.mxu0 0.0
    %221 = vmatprep.subr.mxu0 0.0
    %222 = vmatpush1.msra.mxu0 0.0
    %223 = vmatprep.subr.mxu0 0.0
    %224 = vmatpush1.msra.mxu0 0.0
    %225 = vmatprep.subr.mxu0 0.0
    %226 = vmatpush1.msra.mxu0 0.0
    %227 = vmatprep.subr.mxu0 0.0
    %228 = vmatpush1.msra.mxu0 0.0
    %229 = vmatprep.subr.mxu0 0.0
    %230 = vmatpush1.msra.mxu0 0.0
    %231 = vmatprep.subr.mxu0 0.0
    %232 = vmatpush1.msra.mxu0 0.0
    %233 = vmatprep.subr.mxu0 0.0
    %234 = vmatpush1.msra.mxu0 0.0
    %235 = vmatprep.subr.mxu0 0.0
    %236 = vmatpush1.msra.mxu0 0.0
    %237 = vmatprep.subr.mxu0 0.0
    %238 = vmatpush1.msra.mxu0 0.0
    %239 = vmatprep.subr.mxu0 0.0
    %240 = vmatpush1.msra.mxu0 0.0
    %241 = vmatprep.subr.mxu0 0.0
    %242 = vmatpush1.msra.mxu0 0.0
    %243 = vmatprep.subr.mxu0 0.0
    %244 = vmatpush1.msra.mxu0 0.0
    %245 = vmatprep.subr.mxu0 0.0
    %246 = vmatpush1.msra.mxu0 0.0
    %247 = vmatprep.subr.mxu0 0.0
    %248 = vmatpush1.msra.mxu0 0.0
    %249 = vmatprep.mubr.f32.mxu0 0.0
    %250 = vmatmul.mubr.f32.gmra.mrb[0].mxu0 %v183
    %v251 = vpop.f32.mrb[0].mxu0
    %v252 = vadd.f32 0.0, %v251
    %v253 = vpop.f32.mrb[0].mxu0
    %v254 = vadd.f32 0.0, %v253
    %255 = vdwg.mxu0
    %v258 = vcombine.low %v252, %v254
    %v260 = vunpack.c.l.s4 1983009808
    %v261 = vunpack.c.0.s8 %v260
    %v262 = vlaneseq
    %v263 = vshrl.u32 %v262, 7
    %v264 = vsub.s32 %v261, %v263
    %v265 = vrot.slane %v258, %v264
    %v267 = vmul.f32 %v52, %v265
    %268 = vst [vmem:[#allocation8] sm:$0xf] %v267
    // Predicated region
    $region26: #{tpu_custom_call.1} parent=1 // pred_check
      _
    $region27: #{tpu_custom_call.1} parent=1 // pred_check_branch
      %270 = sbr.rel (0) target = $region29
    $region28: #{tpu_custom_call.1} parent=1 // pred_region
      %s272 = ssub.s32 64, 64
      %273 = vsyncadd [#allocation4], %s272
      %s275 = sshll.u32 [#allocation8], 4
      %s276 = int_to_ptr.vmem [resolvable:$true] %s275
      %278 = dma.vmem_to_hbm [thread:$0]  %s276, 64, %s3, [#allocation4]
    $region29: #{tpu_custom_call.1} parent=1 // pred_fallthru
      _
    // Predicated region
    $region30: #{tpu_custom_call.1} parent=1 // pred_check
      _
    $region31: #{tpu_custom_call.1} parent=1 // pred_check_branch
      %280 = sbr.rel (0) target = $region33
    $region32: #{tpu_custom_call.1} parent=1 // pred_region
      %281 = dma.done [#allocation4], 64
    $region33: #{tpu_custom_call.1} parent=1 // pred_fallthru
      _
    %282 = vsyncpa [#allocation3], 1
    %283 = vsyncpa [#allocation6], 1
    %284 = vsyncpa [#allocation4], 1

</llo_original>
